<compile_context>
chip_gen: v5e
topology: v5e:2x2
jax: 0.10.0
libtpu: 0.0.40
codegen_flags: <defaults>
</compile_context>

<pallas_src>
import jax
import jax.numpy as jnp
from jax.experimental import pallas as pl
from jax.experimental.pallas import tpu as pltpu


def _round_up(x, mult):
    return ((x + mult - 1) // mult) * mult


def _kernel(idx_ref, x_ref, w_ref, eps_ref, out_ref):
    """Per (B-tile, m-tile) step: mixture-mask x, one fused mu|logvar matmul,
    reparameterize.  All operands live in VMEM.

    idx_ref: (TB, 1)  int32   mixture component per batch row
    x_ref:   (TB, n)  f32     raw input (no repeat_interleave in HBM)
    w_ref:   (1, k, n, 2*TM)  fused weights: [..., :TM]=mu, [..., TM:]=logvar
    eps_ref: (TB, TM) f32     standard-normal noise
    out_ref: (TB, TM) f32
    """
    k = w_ref.shape[1]
    tm = w_ref.shape[3] // 2

    x = x_ref[...]                       # (TB, n), stays in vregs across k
    idx = idx_ref[...]                   # (TB, 1) int32

    # sum_c [x masked to rows whose mixture index == c] @ W_c  (W_c: (n, 2*TM))
    # Equivalent to (repeat_interleave(x, k) * one_hot_mask) @ [W_mu|W_logvar].T
    fused = None
    for c in range(k):                   # k is small & static -> unrolled
        xc = jnp.where(idx == c, x, jnp.zeros_like(x))          # (TB, n)
        part = jnp.dot(xc, w_ref[0, c],                         # (TB, 2*TM)
                       preferred_element_type=jnp.float32)
        fused = part if fused is None else fused + part

    mu = fused[:, :tm]                   # lane-aligned slice (tm % 128 == 0)
    logvar = fused[:, tm:]
    std = jnp.exp(0.5 * logvar)          # EUP
    out_ref[...] = (mu + eps_ref[...] * std).astype(out_ref.dtype)


def prepare_params(w_mu, w_logvar, k, tile_m=None):
    """One-time parameter prep (hoisted out of the per-call path).

    Takes torch-layout weights (m, n*k) with columns interleaved as i*k + c and
    returns a fused tensor of shape (m_tiles, k, n, 2*TM) where, for output
    tile jt and mixture component c, w_fused[jt, c] = [W_mu_tile | W_lv_tile]
    with columns jt*TM .. jt*TM+TM-1 (zero-padded past m).
    """
    m, nk = w_mu.shape
    assert w_logvar.shape == (m, nk) and nk % k == 0
    n = nk // k

    tm = tile_m or min(_round_up(m, 128), 256)   # lane-dense N tile
    m_pad = _round_up(m, tm)
    m_tiles = m_pad // tm

    def prep(w):
        w = w.reshape(m, n, k)                       # [j, i, c]
        w = jnp.transpose(w, (2, 1, 0))              # (k, n, m)
        w = jnp.pad(w, ((0, 0), (0, 0), (0, m_pad - m)))
        return w.reshape(k, n, m_tiles, tm)          # [c, i, jt, t]

    wm = prep(w_mu)
    wl = prep(w_logvar)
    w_fused = jnp.concatenate([wm, wl], axis=-1)     # (k, n, m_tiles, 2*tm)
    w_fused = jnp.transpose(w_fused, (2, 0, 1, 3))   # (m_tiles, k, n, 2*tm)

    meta = dict(n=n, k=k, m=m, tm=tm, m_pad=m_pad, m_tiles=m_tiles)
    return w_fused, meta


def _draw_noise(key, batch, m, k, dtype):
    """Mixture index + reparameterization noise (shared with the reference)."""
    key_idx, key_eps = jax.random.split(key)
    idx = jax.random.randint(key_idx, (batch,), 0, k).astype(jnp.int32)
    eps = jax.random.normal(key_eps, (batch, m), dtype=dtype)
    return idx, eps


def prob_mixture_enc_forward(x, w_fused, meta, key, *, tile_b=None):
    """x: (B, n) float32.  w_fused/meta from prepare_params().  Returns (B, m)."""
    n, k, m = meta["n"], meta["k"], meta["m"]
    tm, m_pad, m_tiles = meta["tm"], meta["m_pad"], meta["m_tiles"]
    B = x.shape[0]
    assert x.shape[1] == n

    tb = tile_b or min(_round_up(B, 8), 256)     # sublane-aligned B tile
    b_pad = _round_up(B, tb)

    idx, eps = _draw_noise(key, B, m, k, x.dtype)

    # pad to full tiles (avoids partial-tile masking inside the kernel)
    x_p = jnp.pad(x, ((0, b_pad - B), (0, 0)))
    idx_p = jnp.pad(idx, (0, b_pad - B)).reshape(b_pad, 1)
    eps_p = jnp.pad(eps, ((0, b_pad - B), (0, m_pad - m)))

    grid = (b_pad // tb, m_tiles)

    out = pl.pallas_call(
        _kernel,
        out_shape=jax.ShapeDtypeStruct((b_pad, m_pad), x.dtype),
        grid=grid,
        in_specs=[
            pl.BlockSpec((tb, 1), lambda i, j: (i, 0)),            # idx
            pl.BlockSpec((tb, n), lambda i, j: (i, 0)),            # x
            pl.BlockSpec((1, k, n, 2 * tm), lambda i, j: (j, 0, 0, 0)),  # W
            pl.BlockSpec((tb, tm), lambda i, j: (i, j)),           # eps
        ],
        out_specs=pl.BlockSpec((tb, tm), lambda i, j: (i, j)),
        compiler_params=pltpu.CompilerParams(
            # both axes independent -> shard across the 2 TCs on v7x
            dimension_semantics=("parallel", "parallel"),
            # explicit, well under v7x's 64 MiB physical VMEM
            vmem_limit_bytes=32 * 1024 * 1024,
        ),
    )(idx_p, x_p, w_fused, eps_p)

    return out[:B, :m]


if __name__ == "__main__":
    # small shapes consistent with the module: n features, k mixture comps, m latent
    B, n, m, k = 4, 8, 32, 2

    key = jax.random.PRNGKey(0)
    k_x, k_wmu, k_fwd = jax.random.split(key, 3)

    x = jax.random.normal(k_x, (B, n), dtype=jnp.float32)

    # deterministic parameter init (matches module's initialize() style:
    # gaussian mu weights repeated over k, logvar weights filled with -2)
    w_mu_base = jax.random.normal(k_wmu, (m, n), dtype=jnp.float32)
    w_mu = jnp.repeat(w_mu_base, k, axis=1)                   # (m, n*k)
    w_logvar = jnp.full((m, n * k), -2.0, dtype=jnp.float32)  # (m, n*k)

    # one-time parameter prep, then the Pallas forward
    w_fused, meta = prepare_params(w_mu, w_logvar, k)
    forward = jax.jit(lambda xi, ki: prob_mixture_enc_forward(xi, w_fused, meta, ki))
    out = forward(x, k_fwd)
    jax.block_until_ready(out)

    # pure-JAX reference with the same randomness
    idx_ref, eps_ref = _draw_noise(k_fwd, B, m, k, x.dtype)
    x_rep = jnp.repeat(x, k, axis=1)                          # (B, n*k)
    mask = jnp.tile(jax.nn.one_hot(idx_ref, k, dtype=x.dtype), (1, n))
    xx = x_rep * mask
    mu_ref = xx @ w_mu.T
    lv_ref = xx @ w_logvar.T
    ref = mu_ref + eps_ref * jnp.exp(0.5 * lv_ref)

    assert out.shape == (B, m)
    assert jnp.allclose(out, ref, atol=1e-3, rtol=1e-3), "mismatch vs reference"

    print("KERNEL_OK")
</pallas_src>

<mosaic_0001>
module attributes {stable_mosaic.version = 11 : i64} {
  func.func @_kernel(%arg0: i32, %arg1: i32, %arg2: memref<8x1xi32, #tpu.memory_space<vmem>>, %arg3: memref<8x8xf32, #tpu.memory_space<vmem>>, %arg4: memref<1x2x8x256xf32, #tpu.memory_space<vmem>>, %arg5: memref<8x128xf32, #tpu.memory_space<vmem>>, %arg6: memref<8x128xf32, #tpu.memory_space<vmem>>) attributes {dimension_semantics = [#tpu.dimension_semantics<parallel>, #tpu.dimension_semantics<parallel>], iteration_bounds = array<i64: 1, 1>, scalar_prefetch = 0 : i64, scratch_operands = 0 : i64, tpu.core_type = #tpu.core_type<tc>, window_params = [{transform_indices = @transform_0, window_bounds = array<i64: 8, 1>}, {transform_indices = @transform_1, window_bounds = array<i64: 8, 8>}, {transform_indices = @transform_2, window_bounds = array<i64: 1, 2, 8, 256>}, {transform_indices = @transform_3, window_bounds = array<i64: 8, 128>}, {transform_indices = @transform_4, window_bounds = array<i64: 8, 128>}]} {
    %c0 = arith.constant 0 : index
    %c0_0 = arith.constant 0 : index
    %0 = vector.load %arg3[%c0, %c0_0] : memref<8x8xf32, #tpu.memory_space<vmem>>, vector<8x8xf32>
    %c0_1 = arith.constant 0 : index
    %c0_2 = arith.constant 0 : index
    %1 = vector.load %arg2[%c0_1, %c0_2] : memref<8x1xi32, #tpu.memory_space<vmem>>, vector<8x1xi32>
    %c0_i32 = arith.constant 0 : i32
    %2 = vector.broadcast %c0_i32 : i32 to vector<8x1xi32>
    %3 = arith.cmpi eq, %1, %2 : vector<8x1xi32>
    %cst = arith.constant 0.000000e+00 : f32
    %4 = vector.broadcast %cst : f32 to vector<8x8xf32>
    %5 = vector.shape_cast %3 : vector<8x1xi1> to vector<8x1xi1>
    %6 = vector.broadcast %5 : vector<8x1xi1> to vector<8x8xi1>
    %7 = arith.select %6, %0, %4 : vector<8x8xi1>, vector<8x8xf32>
    %c0_3 = arith.constant 0 : index
    %c0_4 = arith.constant 0 : index
    %c0_5 = arith.constant 0 : index
    %c0_6 = arith.constant 0 : index
    %8 = vector.load %arg4[%c0_3, %c0_4, %c0_5, %c0_6] : memref<1x2x8x256xf32, #tpu.memory_space<vmem>>, vector<1x1x8x256xf32>
    %9 = vector.shape_cast %8 : vector<1x1x8x256xf32> to vector<8x256xf32>
    %cst_7 = arith.constant dense<0.000000e+00> : vector<8x256xf32>
    %10 = tpu.matmul %7, %9, %cst_7 {dimension_numbers = #tpu.dot_dimension_numbers<[1], [0], [0], [1], [0, 0, 1, 1], [], []>} : vector<8x8xf32>, vector<8x256xf32>, vector<8x256xf32> -> vector<8x256xf32>
    %c1_i32 = arith.constant 1 : i32
    %11 = vector.broadcast %c1_i32 : i32 to vector<8x1xi32>
    %12 = arith.cmpi eq, %1, %11 : vector<8x1xi32>
    %cst_8 = arith.constant 0.000000e+00 : f32
    %13 = vector.broadcast %cst_8 : f32 to vector<8x8xf32>
    %14 = vector.shape_cast %12 : vector<8x1xi1> to vector<8x1xi1>
    %15 = vector.broadcast %14 : vector<8x1xi1> to vector<8x8xi1>
    %16 = arith.select %15, %0, %13 : vector<8x8xi1>, vector<8x8xf32>
    %c0_9 = arith.constant 0 : index
    %c1 = arith.constant 1 : index
    %c0_10 = arith.constant 0 : index
    %c0_11 = arith.constant 0 : index
    %17 = vector.load %arg4[%c0_9, %c1, %c0_10, %c0_11] : memref<1x2x8x256xf32, #tpu.memory_space<vmem>>, vector<1x1x8x256xf32>
    %18 = vector.shape_cast %17 : vector<1x1x8x256xf32> to vector<8x256xf32>
    %cst_12 = arith.constant dense<0.000000e+00> : vector<8x256xf32>
    %19 = tpu.matmul %16, %18, %cst_12 {dimension_numbers = #tpu.dot_dimension_numbers<[1], [0], [0], [1], [0, 0, 1, 1], [], []>} : vector<8x8xf32>, vector<8x256xf32>, vector<8x256xf32> -> vector<8x256xf32>
    %20 = arith.addf %10, %19 : vector<8x256xf32>
    %21 = vector.extract_strided_slice %20 {offsets = [0, 0], sizes = [8, 128], strides = [1, 1]} : vector<8x256xf32> to vector<8x128xf32>
    %22 = vector.extract_strided_slice %20 {offsets = [0, 128], sizes = [8, 128], strides = [1, 1]} : vector<8x256xf32> to vector<8x128xf32>
    %cst_13 = arith.constant 5.000000e-01 : f32
    %23 = vector.broadcast %cst_13 : f32 to vector<8x128xf32>
    %24 = arith.mulf %23, %22 : vector<8x128xf32>
    %25 = math.exp %24 : vector<8x128xf32>
    %c0_14 = arith.constant 0 : index
    %c0_15 = arith.constant 0 : index
    %26 = vector.load %arg5[%c0_14, %c0_15] : memref<8x128xf32, #tpu.memory_space<vmem>>, vector<8x128xf32>
    %27 = arith.mulf %26, %25 : vector<8x128xf32>
    %28 = arith.addf %21, %27 : vector<8x128xf32>
    %c0_16 = arith.constant 0 : index
    %c0_17 = arith.constant 0 : index
    %29 = vector.load %arg6[%c0_16, %c0_17] : memref<8x128xf32, #tpu.memory_space<vmem>>, vector<8x128xf32>
    tpu.vector_store %arg6[%c0_16, %c0_17], %28 {strides = array<i32>} : memref<8x128xf32, #tpu.memory_space<vmem>>, vector<8x128xf32>,
    return
  }
  func.func @transform_0(%arg0: i32, %arg1: i32) -> (i32, i32) {
    %c0_i32 = arith.constant 0 : i32
    %c0_i32_0 = arith.constant 0 : i32
    return %arg0, %c0_i32 : i32, i32
  }
  func.func @transform_1(%arg0: i32, %arg1: i32) -> (i32, i32) {
    %c0_i32 = arith.constant 0 : i32
    %c0_i32_0 = arith.constant 0 : i32
    return %arg0, %c0_i32 : i32, i32
  }
  func.func @transform_2(%arg0: i32, %arg1: i32) -> (i32, i32, i32, i32) {
    %c0_i32 = arith.constant 0 : i32
    %c0_i32_0 = arith.constant 0 : i32
    %c0_i32_1 = arith.constant 0 : i32
    %c0_i32_2 = arith.constant 0 : i32
    return %arg1, %c0_i32, %c0_i32_0, %c0_i32_1 : i32, i32, i32, i32
  }
  func.func @transform_3(%arg0: i32, %arg1: i32) -> (i32, i32) {
    %c0_i32 = arith.constant 0 : i32
    return %arg0, %arg1 : i32, i32
  }
  func.func @transform_4(%arg0: i32, %arg1: i32) -> (i32, i32) {
    %c0_i32 = arith.constant 0 : i32
    return %arg0, %arg1 : i32, i32
  }
}

</mosaic_0001>

<llo_original>
// kernel: _lambda_.1
$region0: #{_lambda_.1}
  #allocation0 [shape = 'u32[]', space=smem, size = 0x4, offset = 0x4, fixed_abs, tag = 'smem constant byte address 0x4 - core index']
  #allocation1 [shape = 'u32[72,128]{1,0:T(1,128)}', space=vmem, size = 0x9000, scoped, tag = 'internal scratch']
  %s0 = inlined_call_operand.vmem [shape: s32[8,1], index: 0, kind: input, shape index: {}]
  %s1 = inlined_call_operand.vmem [shape: f32[8,8], index: 1, kind: input, shape index: {}]
  %s2 = inlined_call_operand.vmem [shape: f32[1,2,8,256], index: 2, kind: input, shape index: {}]
  %s3 = inlined_call_operand.vmem [shape: f32[8,128], index: 3, kind: input, shape index: {}]
  %s4 = inlined_call_operand.vmem [shape: f32[8,128], index: 4, kind: output, shape index: {}]
  %s5 = sld [smem:[#allocation0]]
  $region26: #{_lambda_.1} parent=0
    _
  %s7 = ssub.s32 1, %s5
  %s8 = scalar_select 0, %s7, %s5
  // Predicated region
  $region2: #{_lambda_.1} parent=0 // pred_check
    _
  $region3: #{_lambda_.1} parent=0 // pred_check_branch
    %10 = sbr.rel (0) target = $region5
  $region4: #{_lambda_.1} parent=0 // pred_region
    _
  $region5: #{_lambda_.1} parent=0 // pred_fallthru
    _
  // Predicated region
  $region6: #{_lambda_.1} parent=0 // pred_check
    _
  $region7: #{_lambda_.1} parent=0 // pred_check_branch
    %12 = sbr.rel (0) target = $region9
  $region8: #{_lambda_.1} parent=0 // pred_region
    _
  $region9: #{_lambda_.1} parent=0 // pred_fallthru
    _
  // Predicated region
  $region10: #{_lambda_.1} parent=0 // pred_check
    _
  $region11: #{_lambda_.1} parent=0 // pred_check_branch
    %14 = sbr.rel (0) target = $region13
  $region12: #{_lambda_.1} parent=0 // pred_region
    _
  $region13: #{_lambda_.1} parent=0 // pred_fallthru
    _
  // Predicated region
  $region14: #{_lambda_.1} parent=0 // pred_check
    _
  $region15: #{_lambda_.1} parent=0 // pred_check_branch
    %16 = sbr.rel (0) target = $region17
  $region16: #{_lambda_.1} parent=0 // pred_region
    _
  $region17: #{_lambda_.1} parent=0 // pred_fallthru
    _
  %v17 = vld [vmem:[%s1] sm:$0xff]
  %v18 = vld [vmem:[%s0] sm:$0xff]
  %vm19 = vcmp.eq.s32.totalorder %v18, 0
  %v20 = vsel %vm19, 1, 0
  %21 = vset.pattern.permute.xlu0 0
  %22 = vperm.xlu0 %21, %v20
  %v23 = vpop.permute.xlu0 %22
  %vm24 = vcmp.eq.s32.totalorder %v23, 1
  %v25 = vsel %vm24, %v17, 0.0
  %v26 = vld [vmem:[%s2] sm:$0xff]
  %v27 = vld [vmem:[%s2 + $0x8] sm:$0xff]
  %vm28 = vcmp.eq.s32.totalorder %v18, 1
  %v29 = vsel %vm28, 1, 0
  %30 = vset.pattern.permute.xlu0 0
  %31 = vperm.xlu0 %30, %v29
  %v32 = vpop.permute.xlu0 %31
  %vm33 = vcmp.eq.s32.totalorder %v32, 1
  %v34 = vsel %vm33, %v17, 0.0
  %s35 = scalar_lea.vmem %s2, 16
  %v36 = vld [vmem:[%s35] sm:$0xff]
  %v37 = vld [vmem:[%s35 + $0x8] sm:$0xff]
  %vm38 = vcmask 64512
  %v40 = vsel %vm38, %v34, 0
  %42 = vmatpush.msra.mxu0 0.0
  %43 = vmatpush.msra.mxu0 0.0
  %44 = vmatpush.msra.mxu0 0.0
  %45 = vmatpush.msra.mxu0 0.0
  %46 = vmatpush.msra.mxu0 0.0
  %47 = vmatpush.msra.mxu0 0.0
  %48 = vmatpush.msra.mxu0 0.0
  %49 = vmatpush.msra.mxu0 0.0
  %50 = vmatpush.msra.mxu0 0.0
  %51 = vmatpush.msra.mxu0 0.0
  %52 = vmatpush.msra.mxu0 0.0
  %53 = vmatpush.msra.mxu0 0.0
  %54 = vmatpush.msra.mxu0 0.0
  %55 = vmatpush.msra.mxu0 0.0
  %56 = vmatpush.msra.mxu0 0.0
  %57 = vmatpush.msra.mxu0 %v36
  %58 = vmatmul.f32.gmra.mxu0 %v40
  %v59 = vpop.f32.mrf.mxu0
  %v60 = vadd.f32 0.0, %v59
  %61 = vdwg.mxu0
  %62 = vmatpush.msra.mxu0 0.0
  %63 = vmatpush.msra.mxu0 0.0
  %64 = vmatpush.msra.mxu0 0.0
  %65 = vmatpush.msra.mxu0 0.0
  %66 = vmatpush.msra.mxu0 0.0
  %67 = vmatpush.msra.mxu0 0.0
  %68 = vmatpush.msra.mxu0 0.0
  %69 = vmatpush.msra.mxu0 0.0
  %70 = vmatpush.msra.mxu0 0.0
  %71 = vmatpush.msra.mxu0 0.0
  %72 = vmatpush.msra.mxu0 0.0
  %73 = vmatpush.msra.mxu0 0.0
  %74 = vmatpush.msra.mxu0 0.0
  %75 = vmatpush.msra.mxu0 0.0
  %76 = vmatpush.msra.mxu0 0.0
  %77 = vmatpush.msra.mxu0 %v37
  %78 = vmatmul.f32.gmra.mxu0 %v40
  %v79 = vpop.f32.mrf.mxu0
  %v80 = vadd.f32 0.0, %v79
  %81 = vdwg.mxu0
  %v83 = vsel %vm38, %v25, 0
  %85 = vmatpush.msra.mxu0 0.0
  %86 = vmatpush.msra.mxu0 0.0
  %87 = vmatpush.msra.mxu0 0.0
  %88 = vmatpush.msra.mxu0 0.0
  %89 = vmatpush.msra.mxu0 0.0
  %90 = vmatpush.msra.mxu0 0.0
  %91 = vmatpush.msra.mxu0 0.0
  %92 = vmatpush.msra.mxu0 0.0
  %93 = vmatpush.msra.mxu0 0.0
  %94 = vmatpush.msra.mxu0 0.0
  %95 = vmatpush.msra.mxu0 0.0
  %96 = vmatpush.msra.mxu0 0.0
  %97 = vmatpush.msra.mxu0 0.0
  %98 = vmatpush.msra.mxu0 0.0
  %99 = vmatpush.msra.mxu0 0.0
  %100 = vmatpush.msra.mxu0 %v26
  %101 = vmatmul.f32.gmra.mxu0 %v83
  %v102 = vpop.f32.mrf.mxu0
  %v103 = vadd.f32 %v60, %v102
  %104 = vdwg.mxu0
  %105 = vmatpush.msra.mxu0 0.0
  %106 = vmatpush.msra.mxu0 0.0
  %107 = vmatpush.msra.mxu0 0.0
  %108 = vmatpush.msra.mxu0 0.0
  %109 = vmatpush.msra.mxu0 0.0
  %110 = vmatpush.msra.mxu0 0.0
  %111 = vmatpush.msra.mxu0 0.0
  %112 = vmatpush.msra.mxu0 0.0
  %113 = vmatpush.msra.mxu0 0.0
  %114 = vmatpush.msra.mxu0 0.0
  %115 = vmatpush.msra.mxu0 0.0
  %116 = vmatpush.msra.mxu0 0.0
  %117 = vmatpush.msra.mxu0 0.0
  %118 = vmatpush.msra.mxu0 0.0
  %119 = vmatpush.msra.mxu0 0.0
  %120 = vmatpush.msra.mxu0 %v27
  %121 = vmatmul.f32.gmra.mxu0 %v83
  %v122 = vpop.f32.mrf.mxu0
  %v123 = vadd.f32 %v80, %v122
  %124 = vdwg.mxu0
  %v125 = vmul.f32 %v123, 0.5
  %v126 = vmul.f32 %v125, 1.442695
  %v127 = vpow.pop %v126
  %v128 = vld [vmem:[%s3] sm:$0xff]
  %v129 = vmul.f32 %v128, %v127
  %v130 = vadd.f32 %v103, %v129
  %131 = vst [vmem:[%s4] sm:$0xff] %v130
  // Predicated region
  $region18: #{_lambda_.1} parent=0 // pred_check
    _
  $region19: #{_lambda_.1} parent=0 // pred_check_branch
    %133 = sbr.rel (0) target = $region21
  $region20: #{_lambda_.1} parent=0 // pred_region
    _
  $region21: #{_lambda_.1} parent=0 // pred_fallthru
    _
  // Predicated region
  $region22: #{_lambda_.1} parent=0 // pred_check
    _
  $region23: #{_lambda_.1} parent=0 // pred_check_branch
    %135 = sbr.rel (0) target = $region25
  $region24: #{_lambda_.1} parent=0 // pred_region
    _
  $region25: #{_lambda_.1} parent=0 // pred_fallthru
    _

</llo_original>
